<compile_context>
chip_gen: v5e
topology: v5e:2x2
jax: 0.10.0
libtpu: 0.0.40
codegen_flags: <defaults>
</compile_context>

<pallas_src>
import jax
import jax.numpy as jnp
from jax.experimental import pallas as pl
from jax.experimental.pallas import tpu as pltpu

EPS = 1e-16
LANE = 128


def make_jsd_kernel(n, tr, rows, steps, inv_n, needs_mask):
    """Kernel over n model tiles of shape (tr, 128).

    Accumulates (positive) sums of x*log(x+eps) and mean_p*log(mean_p+eps)
    into resident (1, 8, 128) f32 output blocks; the single cross-lane reduce,
    the minus sign and the 'mean' normalization happen in the wrapper.
    """

    def kernel(*refs):
        x_refs = refs[:n]
        f_ref = refs[n]       # (1, 8, 128) partial sum of mean_p*log(mean_p+eps)
        e_ref = refs[n + 1]   # (1, 8, 128) partial sum of x*log(x+eps)

        i = pl.program_id(0)
        j = pl.program_id(1)

        @pl.when(j == 0)
        def _():
            f_ref[...] = jnp.zeros_like(f_ref)
            e_ref[...] = jnp.zeros_like(e_ref)

        if needs_mask:
            # Grid over-runs the (rows, 128) slab; mask rows past the real row
            # count.  Zeroing x BEFORE the log keeps garbage/NaN fill at
            # exactly 0 contribution (0 * log(0 + eps) == 0).
            row_start = (i * steps + j) * tr
            row_ids = jax.lax.broadcasted_iota(jnp.int32, (tr, LANE), 0)
            valid = (row_ids + row_start) < rows
        else:
            valid = None

        def load(k):
            xk = x_refs[k][...].astype(jnp.float32)
            if valid is not None:
                xk = jnp.where(valid, xk, 0.0)
            return xk

        def fold(t):
            # (tr, 128) -> (8, 128) with vreg-aligned elementwise adds; the
            # expensive cross-lane reduce happens once, in the wrapper.
            return jnp.sum(t.reshape(tr // 8, 8, LANE), axis=0)

        # Single pass over the N models: per-model entropy terms folded into a
        # small accumulator, plus the running sum for the mean distribution.
        x0 = load(0)
        e_acc = fold(x0 * jnp.log(x0 + EPS))
        p_sum = x0
        for k in range(1, n):
            xk = load(k)
            e_acc = e_acc + fold(xk * jnp.log(xk + EPS))
            p_sum = p_sum + xk

        mean_p = p_sum * inv_n
        f_acc = fold(mean_p * jnp.log(mean_p + EPS))

        e_ref[...] += e_acc[None]
        f_ref[...] += f_acc[None]

    return kernel


def jsd_div(probs_list, *, tr=2048, num_slices=1):
    """JSD_div.forward with reduction='mean'. Returns (f_term, mean_entropy).

    num_slices: leading 'parallel' grid axis (per-slice partial accumulators).
    Keep 1 on single-TC chips (v5e/v6e); set 2 on v7x to shard across its TCs.
    """
    n = len(probs_list)
    assert n >= 1
    b, c, h, w = probs_list[0].shape
    m = b * h * w                      # Entropy('mean') normalizer: B * spatial
    total = b * c * h * w

    P = max(1, int(num_slices))

    # Lane-dense slab.  Common case (total % 128 == 0): pure reshape, no copy.
    if total % LANE == 0:
        rows = total // LANE

        def to_rows(p):
            return p.reshape(rows, LANE)
    else:
        # Rare ragged tail: pad the flat array to a LANE multiple (zeros
        # contribute exactly 0 to both entropy terms).
        rows = pl.cdiv(total, LANE)
        pad = rows * LANE - total

        def to_rows(p):
            return jnp.pad(p.reshape(-1), (0, pad)).reshape(rows, LANE)

    xs = [to_rows(p) for p in probs_list]
    itemsize = jnp.dtype(xs[0].dtype).itemsize

    # VMEM budget per row of tile:
    #   2*n double-buffered input blocks (native dtype)
    #   + ~4 full-tile f32 temporaries (x, per-term, p_sum, mean_p/f_tile)
    # kept under ~20 MiB so it fits the 32 MiB scoped limit with headroom
    # (v7x has only 64 MiB physical VMEM).
    bytes_per_row = LANE * (2 * n * itemsize + 4 * 4)
    max_tr = max(8, (20 * 1024 * 1024) // bytes_per_row)
    tr = min(tr, max_tr, max(8, pl.cdiv(rows, P)))
    tr = ((tr + 7) // 8) * 8           # sublane-aligned tile

    steps = pl.cdiv(pl.cdiv(rows, P), tr)
    needs_mask = (P * steps * tr) > rows   # static: only mask if we can over-run

    in_specs = [
        pl.BlockSpec((tr, LANE), lambda i, j, s=steps: (i * s + j, 0))
        for _ in range(n)
    ]
    out_specs = (
        pl.BlockSpec((1, 8, LANE), lambda i, j: (i, 0, 0)),
        pl.BlockSpec((1, 8, LANE), lambda i, j: (i, 0, 0)),
    )

    f_part, e_part = pl.pallas_call(
        make_jsd_kernel(n, tr, rows, steps, 1.0 / n, needs_mask),
        out_shape=(
            jax.ShapeDtypeStruct((P, 8, LANE), jnp.float32),
            jax.ShapeDtypeStruct((P, 8, LANE), jnp.float32),
        ),
        grid_spec=pltpu.PrefetchScalarGridSpec(
            num_scalar_prefetch=0,
            grid=(P, steps),
            in_specs=in_specs,
            out_specs=out_specs,
        ),
        compiler_params=pltpu.CompilerParams(
            dimension_semantics=("parallel", "arbitrary"),
            vmem_limit_bytes=32 * 1024 * 1024,
        ),
    )(*xs)

    # Final (tiny) cross-lane/cross-slice reductions, minus sign, and 'mean'.
    f_term = -jnp.sum(f_part) / m
    mean_entropy = -jnp.sum(e_part) / (n * m)
    return f_term, mean_entropy


# ----- plain-JAX reference (mirrors the PyTorch module) -----
def _entropy_mean_ref(p):
    e = -(p * jnp.log(p + EPS)).sum(axis=1)   # sum over channel dim 1
    return e.mean()


def _jsd_ref(probs_list):
    mean_prob = sum(probs_list) / len(probs_list)
    f_term = _entropy_mean_ref(mean_prob)
    mean_entropy = sum(_entropy_mean_ref(p) for p in probs_list) / len(probs_list)
    return f_term, mean_entropy


if __name__ == "__main__":
    key = jax.random.PRNGKey(0)
    B, C, H, W = 2, 4, 16, 16
    N_MODELS = 3

    keys = jax.random.split(key, N_MODELS)
    # simplex inputs: softmax over the channel dimension (dim 1), NCHW
    probs = [
        jax.nn.softmax(jax.random.normal(k, (B, C, H, W), dtype=jnp.float32), axis=1)
        for k in keys
    ]

    # TODO(synk): the PyTorch module's host-side simplex/shape asserts and the
    # 'none'/'sum' reduction variants are intentionally not reproduced here.
    f_term, mean_entropy = jsd_div(probs)
    f_term = jax.block_until_ready(f_term)
    mean_entropy = jax.block_until_ready(mean_entropy)

    f_ref, me_ref = _jsd_ref(probs)
    assert jnp.allclose(f_term, f_ref, rtol=1e-5, atol=1e-6), (f_term, f_ref)
    assert jnp.allclose(mean_entropy, me_ref, rtol=1e-5, atol=1e-6), (mean_entropy, me_ref)

    print("KERNEL_OK")
</pallas_src>

<mosaic_0001>
module attributes {stable_mosaic.version = 11 : i64} {
  func.func @kernel(%arg0: i32, %arg1: i32, %arg2: memref<16x128xf32, #tpu.memory_space<vmem>>, %arg3: memref<16x128xf32, #tpu.memory_space<vmem>>, %arg4: memref<16x128xf32, #tpu.memory_space<vmem>>, %arg5: memref<1x8x128xf32, #tpu.memory_space<vmem>>, %arg6: memref<1x8x128xf32, #tpu.memory_space<vmem>>) attributes {dimension_semantics = [#tpu.dimension_semantics<parallel>, #tpu.dimension_semantics<arbitrary>], iteration_bounds = array<i64: 1, 1>, scalar_prefetch = 0 : i64, scratch_operands = 0 : i64, tpu.core_type = #tpu.core_type<tc>, window_params = [{transform_indices = @transform_0, window_bounds = array<i64: 16, 128>}, {transform_indices = @transform_1, window_bounds = array<i64: 16, 128>}, {transform_indices = @transform_2, window_bounds = array<i64: 16, 128>}, {transform_indices = @transform_3, window_bounds = array<i64: 1, 8, 128>}, {transform_indices = @transform_4, window_bounds = array<i64: 1, 8, 128>}]} {
    %c0_i32 = arith.constant 0 : i32
    %0 = arith.cmpi eq, %arg1, %c0_i32 : i32
    %1 = arith.extui %0 : i1 to i32
    %c0_i32_0 = arith.constant 0 : i32
    %2 = arith.cmpi ne, %1, %c0_i32_0 : i32
    scf.if %2 {
      %cst_26 = arith.constant 0.000000e+00 : f32
      %44 = vector.broadcast %cst_26 : f32 to vector<1x8x128xf32>
      %c0_27 = arith.constant 0 : index
      %c0_28 = arith.constant 0 : index
      %c0_29 = arith.constant 0 : index
      %45 = vector.load %arg5[%c0_27, %c0_28, %c0_29] : memref<1x8x128xf32, #tpu.memory_space<vmem>>, vector<1x8x128xf32>
      tpu.vector_store %arg5[%c0_27, %c0_28, %c0_29], %44 {strides = array<i32>} : memref<1x8x128xf32, #tpu.memory_space<vmem>>, vector<1x8x128xf32>,
      %cst_30 = arith.constant 0.000000e+00 : f32
      %46 = vector.broadcast %cst_30 : f32 to vector<1x8x128xf32>
      %c0_31 = arith.constant 0 : index
      %c0_32 = arith.constant 0 : index
      %c0_33 = arith.constant 0 : index
      %47 = vector.load %arg6[%c0_31, %c0_32, %c0_33] : memref<1x8x128xf32, #tpu.memory_space<vmem>>, vector<1x8x128xf32>
      tpu.vector_store %arg6[%c0_31, %c0_32, %c0_33], %46 {strides = array<i32>} : memref<1x8x128xf32, #tpu.memory_space<vmem>>, vector<1x8x128xf32>,
    } else {
    }
    %c0 = arith.constant 0 : index
    %c0_1 = arith.constant 0 : index
    %3 = vector.load %arg2[%c0, %c0_1] : memref<16x128xf32, #tpu.memory_space<vmem>>, vector<16x128xf32>
    %cst = arith.constant 1.000000e-16 : f32
    %4 = vector.broadcast %cst : f32 to vector<16x128xf32>
    %5 = arith.addf %3, %4 : vector<16x128xf32>
    %6 = math.log %5 : vector<16x128xf32>
    %7 = arith.mulf %3, %6 : vector<16x128xf32>
    %8 = vector.shape_cast %7 : vector<16x128xf32> to vector<2x8x128xf32>
    %cst_2 = arith.constant dense<0.000000e+00> : vector<8x128xf32>
    %9 = vector.multi_reduction <add>, %8, %cst_2 [0] : vector<2x8x128xf32> to vector<8x128xf32>
    %c0_3 = arith.constant 0 : index
    %c0_4 = arith.constant 0 : index
    %10 = vector.load %arg3[%c0_3, %c0_4] : memref<16x128xf32, #tpu.memory_space<vmem>>, vector<16x128xf32>
    %cst_5 = arith.constant 1.000000e-16 : f32
    %11 = vector.broadcast %cst_5 : f32 to vector<16x128xf32>
    %12 = arith.addf %10, %11 : vector<16x128xf32>
    %13 = math.log %12 : vector<16x128xf32>
    %14 = arith.mulf %10, %13 : vector<16x128xf32>
    %15 = vector.shape_cast %14 : vector<16x128xf32> to vector<2x8x128xf32>
    %cst_6 = arith.constant dense<0.000000e+00> : vector<8x128xf32>
    %16 = vector.multi_reduction <add>, %15, %cst_6 [0] : vector<2x8x128xf32> to vector<8x128xf32>
    %17 = arith.addf %9, %16 : vector<8x128xf32>
    %18 = arith.addf %3, %10 : vector<16x128xf32>
    %c0_7 = arith.constant 0 : index
    %c0_8 = arith.constant 0 : index
    %19 = vector.load %arg4[%c0_7, %c0_8] : memref<16x128xf32, #tpu.memory_space<vmem>>, vector<16x128xf32>
    %cst_9 = arith.constant 1.000000e-16 : f32
    %20 = vector.broadcast %cst_9 : f32 to vector<16x128xf32>
    %21 = arith.addf %19, %20 : vector<16x128xf32>
    %22 = math.log %21 : vector<16x128xf32>
    %23 = arith.mulf %19, %22 : vector<16x128xf32>
    %24 = vector.shape_cast %23 : vector<16x128xf32> to vector<2x8x128xf32>
    %cst_10 = arith.constant dense<0.000000e+00> : vector<8x128xf32>
    %25 = vector.multi_reduction <add>, %24, %cst_10 [0] : vector<2x8x128xf32> to vector<8x128xf32>
    %26 = arith.addf %17, %25 : vector<8x128xf32>
    %27 = arith.addf %18, %19 : vector<16x128xf32>
    %cst_11 = arith.constant 0.333333343 : f32
    %28 = vector.broadcast %cst_11 : f32 to vector<16x128xf32>
    %29 = arith.mulf %27, %28 : vector<16x128xf32>
    %cst_12 = arith.constant 1.000000e-16 : f32
    %30 = vector.broadcast %cst_12 : f32 to vector<16x128xf32>
    %31 = arith.addf %29, %30 : vector<16x128xf32>
    %32 = math.log %31 : vector<16x128xf32>
    %33 = arith.mulf %29, %32 : vector<16x128xf32>
    %34 = vector.shape_cast %33 : vector<16x128xf32> to vector<2x8x128xf32>
    %cst_13 = arith.constant dense<0.000000e+00> : vector<8x128xf32>
    %35 = vector.multi_reduction <add>, %34, %cst_13 [0] : vector<2x8x128xf32> to vector<8x128xf32>
    %c0_14 = arith.constant 0 : index
    %c0_15 = arith.constant 0 : index
    %c0_16 = arith.constant 0 : index
    %36 = vector.load %arg6[%c0_14, %c0_15, %c0_16] : memref<1x8x128xf32, #tpu.memory_space<vmem>>, vector<1x8x128xf32>
    %37 = vector.shape_cast %26 : vector<8x128xf32> to vector<1x8x128xf32>
    %38 = arith.addf %36, %37 : vector<1x8x128xf32>
    %c0_17 = arith.constant 0 : index
    %c0_18 = arith.constant 0 : index
    %c0_19 = arith.constant 0 : index
    %39 = vector.load %arg6[%c0_17, %c0_18, %c0_19] : memref<1x8x128xf32, #tpu.memory_space<vmem>>, vector<1x8x128xf32>
    tpu.vector_store %arg6[%c0_17, %c0_18, %c0_19], %38 {strides = array<i32>} : memref<1x8x128xf32, #tpu.memory_space<vmem>>, vector<1x8x128xf32>,
    %c0_20 = arith.constant 0 : index
    %c0_21 = arith.constant 0 : index
    %c0_22 = arith.constant 0 : index
    %40 = vector.load %arg5[%c0_20, %c0_21, %c0_22] : memref<1x8x128xf32, #tpu.memory_space<vmem>>, vector<1x8x128xf32>
    %41 = vector.shape_cast %35 : vector<8x128xf32> to vector<1x8x128xf32>
    %42 = arith.addf %40, %41 : vector<1x8x128xf32>
    %c0_23 = arith.constant 0 : index
    %c0_24 = arith.constant 0 : index
    %c0_25 = arith.constant 0 : index
    %43 = vector.load %arg5[%c0_23, %c0_24, %c0_25] : memref<1x8x128xf32, #tpu.memory_space<vmem>>, vector<1x8x128xf32>
    tpu.vector_store %arg5[%c0_23, %c0_24, %c0_25], %42 {strides = array<i32>} : memref<1x8x128xf32, #tpu.memory_space<vmem>>, vector<1x8x128xf32>,
    return
  }
  func.func @transform_0(%arg0: i32, %arg1: i32) -> (i32, i32) {
    %c1_i32 = arith.constant 1 : i32
    %0 = arith.muli %arg0, %c1_i32 : i32
    %1 = arith.addi %0, %arg1 : i32
    %c0_i32 = arith.constant 0 : i32
    %c0_i32_0 = arith.constant 0 : i32
    return %1, %c0_i32 : i32, i32
  }
  func.func @transform_1(%arg0: i32, %arg1: i32) -> (i32, i32) {
    %c1_i32 = arith.constant 1 : i32
    %0 = arith.muli %arg0, %c1_i32 : i32
    %1 = arith.addi %0, %arg1 : i32
    %c0_i32 = arith.constant 0 : i32
    %c0_i32_0 = arith.constant 0 : i32
    return %1, %c0_i32 : i32, i32
  }
  func.func @transform_2(%arg0: i32, %arg1: i32) -> (i32, i32) {
    %c1_i32 = arith.constant 1 : i32
    %0 = arith.muli %arg0, %c1_i32 : i32
    %1 = arith.addi %0, %arg1 : i32
    %c0_i32 = arith.constant 0 : i32
    %c0_i32_0 = arith.constant 0 : i32
    return %1, %c0_i32 : i32, i32
  }
  func.func @transform_3(%arg0: i32, %arg1: i32) -> (i32, i32, i32) {
    %c0_i32 = arith.constant 0 : i32
    %c0_i32_0 = arith.constant 0 : i32
    %c0_i32_1 = arith.constant 0 : i32
    return %arg0, %c0_i32, %c0_i32_0 : i32, i32, i32
  }
  func.func @transform_4(%arg0: i32, %arg1: i32) -> (i32, i32, i32) {
    %c0_i32 = arith.constant 0 : i32
    %c0_i32_0 = arith.constant 0 : i32
    %c0_i32_1 = arith.constant 0 : i32
    return %arg0, %c0_i32, %c0_i32_0 : i32, i32, i32
  }
}

</mosaic_0001>

<llo_original>
// kernel: tpu_custom_call.1
$region0: #{tpu_custom_call.1}
  #allocation0 [shape = 'u32[]', space=smem, size = 0x4, offset = 0x4, fixed_abs, tag = 'smem constant byte address 0x4 - core index']
  #allocation1 [shape = 'u32[72,128]{1,0:T(1,128)}', space=vmem, size = 0x9000, scoped, tag = 'internal scratch']
  %s0 = inlined_call_operand.hbm [shape: f32[16,128], index: 0, kind: input, shape index: {}]
  %s1 = inlined_call_operand.hbm [shape: f32[16,128], index: 1, kind: input, shape index: {}]
  %s2 = inlined_call_operand.hbm [shape: f32[16,128], index: 2, kind: input, shape index: {}]
  %s3 = inlined_call_operand.hbm [shape: f32[1,8,128], index: 3, kind: output, shape index: {0}]
  %s4 = inlined_call_operand.hbm [shape: f32[1,8,128], index: 4, kind: output, shape index: {1}]
  %5 = xla_tuple %s3, %s4
  %s6 = sld [smem:[#allocation0]]
  $region46: #{tpu_custom_call.1} parent=0
    _
  %s8 = ssub.s32 1, %s6
  %s9 = scalar_select 0, %s8, %s6
  $region1: #{tpu_custom_call.1} parent=0
    #allocation2 [shape = 'u8[8192]{0}', space=vmem, size = 0x2000, scoped, tag = 'input window, operand 0, single buffered']
    #allocation3 [shape = 's32[1]{0}', space=sflag, size = 0x4, scoped, tag = 'scoped memory for tpu_custom_call.1']
    #allocation4 [shape = 's32[1]{0}', space=sflag, size = 0x4, scoped, tag = 'scoped memory for tpu_custom_call.1']
    #allocation5 [shape = 'u8[8192]{0}', space=vmem, size = 0x2000, scoped, tag = 'input window, operand 1, single buffered']
    #allocation6 [shape = 's32[1]{0}', space=sflag, size = 0x4, scoped, tag = 'scoped memory for tpu_custom_call.1']
    #allocation7 [shape = 'u8[8192]{0}', space=vmem, size = 0x2000, scoped, tag = 'input window, operand 2, single buffered']
    #allocation8 [shape = 'u8[4096]{0}', space=vmem, size = 0x1000, scoped, tag = 'output window, operand 0, single buffered']
    #allocation9 [shape = 'u8[4096]{0}', space=vmem, size = 0x1000, scoped, tag = 'output window, operand 1, single buffered']
    #allocation10 [shape = 's32[1]{0}', space=sflag, size = 0x4, scoped, tag = 'scoped memory for tpu_custom_call.1']
    %10 = vsyncpa [#allocation3], 0
    %11 = vsyncpa [#allocation6], 0
    %12 = vsyncpa [#allocation4], 0
    %13 = vsyncpa [#allocation10], 0
    // Predicated region
    $region2: #{tpu_custom_call.1} parent=1 // pred_check
      _
    $region3: #{tpu_custom_call.1} parent=1 // pred_check_branch
      %15 = sbr.rel (0) target = $region5
    $region4: #{tpu_custom_call.1} parent=1 // pred_region
      %s16 = sadd.s32 0, 0
      %s17 = smul.u32 2, %s16
      %19 = vsyncadd [#allocation3], 0
      %s20 = smul.addr %s17, 8
      %s21 = scalar_lea.hbm %s0, %s20
      %s22 = sshll.u32 %s21, 4
      %s23 = int_to_ptr.hbm [resolvable:$true] %s22
      %s24 = sshll.u32 [#allocation2], 4
      %s25 = int_to_ptr.vmem [resolvable:$true] %s24
      %30 = dma.hbm_to_vmem [thread:$0]  %s23, 256, %s25, [#allocation3], 128, 128, 8
    $region5: #{tpu_custom_call.1} parent=1 // pred_fallthru
      _
    // Predicated region
    $region6: #{tpu_custom_call.1} parent=1 // pred_check
      _
    $region7: #{tpu_custom_call.1} parent=1 // pred_check_branch
      %32 = sbr.rel (0) target = $region9
    $region8: #{tpu_custom_call.1} parent=1 // pred_region
      %s33 = sadd.s32 0, 0
      %s34 = smul.u32 2, %s33
      %36 = vsyncadd [#allocation6], 0
      %s37 = smul.addr %s34, 8
      %s38 = scalar_lea.hbm %s1, %s37
      %s39 = sshll.u32 %s38, 4
      %s40 = int_to_ptr.hbm [resolvable:$true] %s39
      %s41 = sshll.u32 [#allocation5], 4
      %s42 = int_to_ptr.vmem [resolvable:$true] %s41
      %47 = dma.hbm_to_vmem [thread:$0]  %s40, 256, %s42, [#allocation6], 128, 128, 8
    $region9: #{tpu_custom_call.1} parent=1 // pred_fallthru
      _
    // Predicated region
    $region10: #{tpu_custom_call.1} parent=1 // pred_check
      _
    $region11: #{tpu_custom_call.1} parent=1 // pred_check_branch
      %49 = sbr.rel (0) target = $region13
    $region12: #{tpu_custom_call.1} parent=1 // pred_region
      %s50 = sadd.s32 0, 0
      %s51 = smul.u32 2, %s50
      %53 = vsyncadd [#allocation6], 0
      %s54 = smul.addr %s51, 8
      %s55 = scalar_lea.hbm %s2, %s54
      %s56 = sshll.u32 %s55, 4
      %s57 = int_to_ptr.hbm [resolvable:$true] %s56
      %s58 = sshll.u32 [#allocation7], 4
      %s59 = int_to_ptr.vmem [resolvable:$true] %s58
      %64 = dma.hbm_to_vmem [thread:$0]  %s57, 256, %s59, [#allocation6], 128, 128, 8
    $region13: #{tpu_custom_call.1} parent=1 // pred_fallthru
      _
    // Predicated region
    $region14: #{tpu_custom_call.1} parent=1 // pred_check
      _
    $region15: #{tpu_custom_call.1} parent=1 // pred_check_branch
      %66 = sbr.rel (0) target = $region17
    $region16: #{tpu_custom_call.1} parent=1 // pred_region
      %68 = dma.done [#allocation3], 256
    $region17: #{tpu_custom_call.1} parent=1 // pred_fallthru
      _
    // Predicated region
    $region18: #{tpu_custom_call.1} parent=1 // pred_check
      _
    $region19: #{tpu_custom_call.1} parent=1 // pred_check_branch
      %70 = sbr.rel (0) target = $region21
    $region20: #{tpu_custom_call.1} parent=1 // pred_region
      %72 = dma.done [#allocation6], 256
    $region21: #{tpu_custom_call.1} parent=1 // pred_fallthru
      _
    // Predicated region
    $region22: #{tpu_custom_call.1} parent=1 // pred_check
      _
    $region23: #{tpu_custom_call.1} parent=1 // pred_check_branch
      %74 = sbr.rel (0) target = $region25
    $region24: #{tpu_custom_call.1} parent=1 // pred_region
      %76 = dma.done [#allocation6], 256
    $region25: #{tpu_custom_call.1} parent=1 // pred_fallthru
      _
    %s77 = sadd.s32 0, 0
    %s78 = smul.u32 2, %s77
    %s79 = sadd.s32 0, 0
    %s80 = smul.u32 2, %s79
    %s81 = sadd.s32 0, 0
    %s82 = smul.u32 2, %s81
    %p83 = scmp.eq.s32.totalorder 0, 0
    // Predicated region
    $region26: #{tpu_custom_call.1} parent=1 // pred_check
      %p84 = pneg %p83
    $region27: #{tpu_custom_call.1} parent=1 // pred_check_branch
      %86 = sbr.rel (%p84) target = $region29
    $region28: #{tpu_custom_call.1} parent=1 // pred_region
      %87 = vst [vmem:[#allocation8] sm:$0xff] 0.0
      %88 = vst [vmem:[#allocation9] sm:$0xff] 0.0
    $region29: #{tpu_custom_call.1} parent=1 // pred_fallthru
      _
    %v89 = vld [vmem:[#allocation2] sm:$0xff]
    %v90 = vld [vmem:[#allocation2 + $0x8] sm:$0xff]
    %v91 = vadd.f32 %v89, 1e-16
    %v92 = vadd.f32 %v90, 1e-16
    %v93 = vlog2.pop %v91
    %v94 = vmul.f32 %v93, 0.6931472
    %v95 = vlog2.pop %v92
    %v96 = vmul.f32 %v95, 0.6931472
    %v97 = vmul.f32 %v89, %v94
    %v98 = vmul.f32 %v90, %v96
    %v99 = vadd.f32 %v97, %v98
    %v100 = vld [vmem:[#allocation5] sm:$0xff]
    %v101 = vld [vmem:[#allocation5 + $0x8] sm:$0xff]
    %v102 = vadd.f32 %v100, 1e-16
    %v103 = vadd.f32 %v101, 1e-16
    %v104 = vlog2.pop %v102
    %v105 = vmul.f32 %v104, 0.6931472
    %v106 = vlog2.pop %v103
    %v107 = vmul.f32 %v106, 0.6931472
    %v108 = vmul.f32 %v100, %v105
    %v109 = vmul.f32 %v101, %v107
    %v110 = vadd.f32 %v108, %v109
    %v111 = vadd.f32 %v99, %v110
    %v112 = vadd.f32 %v89, %v100
    %v113 = vadd.f32 %v90, %v101
    %v114 = vld [vmem:[#allocation7] sm:$0xff]
    %v115 = vld [vmem:[#allocation7 + $0x8] sm:$0xff]
    %v116 = vadd.f32 %v114, 1e-16
    %v117 = vadd.f32 %v115, 1e-16
    %v118 = vlog2.pop %v116
    %v119 = vmul.f32 %v118, 0.6931472
    %v120 = vlog2.pop %v117
    %v121 = vmul.f32 %v120, 0.6931472
    %v122 = vmul.f32 %v114, %v119
    %v123 = vmul.f32 %v115, %v121
    %v124 = vadd.f32 %v122, %v123
    %v125 = vadd.f32 %v111, %v124
    %v126 = vadd.f32 %v112, %v114
    %v127 = vadd.f32 %v113, %v115
    %v128 = vmul.f32 %v126, 0.33333334
    %v129 = vmul.f32 %v127, 0.33333334
    %v130 = vadd.f32 %v128, 1e-16
    %v131 = vadd.f32 %v129, 1e-16
    %v132 = vlog2.pop %v130
    %v133 = vmul.f32 %v132, 0.6931472
    %v134 = vlog2.pop %v131
    %v135 = vmul.f32 %v134, 0.6931472
    %v136 = vmul.f32 %v128, %v133
    %v137 = vmul.f32 %v129, %v135
    %v138 = vadd.f32 %v136, %v137
    %v139 = vld [vmem:[#allocation9] sm:$0xff]
    %v140 = vadd.f32 %v139, %v125
    %141 = vst [vmem:[#allocation9] sm:$0xff] %v140
    %v142 = vld [vmem:[#allocation8] sm:$0xff]
    %v143 = vadd.f32 %v142, %v138
    %144 = vst [vmem:[#allocation8] sm:$0xff] %v143
    // Predicated region
    $region30: #{tpu_custom_call.1} parent=1 // pred_check
      _
    $region31: #{tpu_custom_call.1} parent=1 // pred_check_branch
      %146 = sbr.rel (0) target = $region33
    $region32: #{tpu_custom_call.1} parent=1 // pred_region
      %148 = vsyncadd [#allocation4], 0
      %s150 = sshll.u32 [#allocation8], 4
      %s151 = int_to_ptr.vmem [resolvable:$true] %s150
      %s152 = sshll.u32 %s3, 4
      %s153 = int_to_ptr.hbm [resolvable:$true] %s152
      %155 = dma.vmem_to_hbm [thread:$0]  %s151, 128, %s153, [#allocation4]
    $region33: #{tpu_custom_call.1} parent=1 // pred_fallthru
      _
    // Predicated region
    $region34: #{tpu_custom_call.1} parent=1 // pred_check
      _
    $region35: #{tpu_custom_call.1} parent=1 // pred_check_branch
      %157 = sbr.rel (0) target = $region37
    $region36: #{tpu_custom_call.1} parent=1 // pred_region
      %159 = vsyncadd [#allocation10], 0
      %s161 = sshll.u32 [#allocation9], 4
      %s162 = int_to_ptr.vmem [resolvable:$true] %s161
      %s163 = sshll.u32 %s4, 4
      %s164 = int_to_ptr.hbm [resolvable:$true] %s163
      %166 = dma.vmem_to_hbm [thread:$0]  %s162, 128, %s164, [#allocation10]
    $region37: #{tpu_custom_call.1} parent=1 // pred_fallthru
      _
    // Predicated region
    $region38: #{tpu_custom_call.1} parent=1 // pred_check
      _
    $region39: #{tpu_custom_call.1} parent=1 // pred_check_branch
      %168 = sbr.rel (0) target = $region41
    $region40: #{tpu_custom_call.1} parent=1 // pred_region
      %170 = dma.done [#allocation4], 128
    $region41: #{tpu_custom_call.1} parent=1 // pred_fallthru
      _
    // Predicated region
    $region42: #{tpu_custom_call.1} parent=1 // pred_check
      _
    $region43: #{tpu_custom_call.1} parent=1 // pred_check_branch
      %172 = sbr.rel (0) target = $region45
    $region44: #{tpu_custom_call.1} parent=1 // pred_region
      %174 = dma.done [#allocation10], 128
    $region45: #{tpu_custom_call.1} parent=1 // pred_fallthru
      _
    %175 = vsyncpa [#allocation3], 1
    %176 = vsyncpa [#allocation6], 1
    %177 = vsyncpa [#allocation4], 1
    %178 = vsyncpa [#allocation10], 1

</llo_original>
